<compile_context>
chip_gen: v5e
topology: v5e:2x2
jax: 0.10.0
libtpu: 0.0.40
codegen_flags: <defaults>
</compile_context>

<pallas_src>
import jax
import jax.numpy as jnp
from jax.experimental import pallas as pl
from jax.experimental.pallas import tpu as pltpu

HIDDEN_DIM = 64
NEG_SLOPE = 0.2
LANE = 128
SUBLANE = 8


def _round_up(x, m):
    return ((x + m - 1) // m) * m


def _leaky_relu(x):
    # mul + max (2 VALU ops) instead of cmp + mul + select (3 VALU ops).
    return jnp.maximum(x, NEG_SLOPE * x)


def _generator_kernel(z_ref, w1_ref, b1_ref, w2_ref, b2_ref, w3_ref, b3_ref, o_ref):
    def mm(x, w_ref):
        # Weights (and z) already arrive in the matmul dtype -- cast at the
        # HBM boundary in the wrapper.  Only the f32 inter-layer activation
        # needs a cast here (a no-op on the pure f32 path).  Always
        # accumulate in f32 on the MXU.
        return jnp.dot(
            x.astype(w_ref.dtype), w_ref[...], preferred_element_type=jnp.float32
        )

    # Elementwise (bias add, LeakyReLU) stays in f32 on the VPU.
    h = _leaky_relu(mm(z_ref[...], w1_ref) + b1_ref[...])
    h = _leaky_relu(mm(h, w2_ref) + b2_ref[...])
    o_ref[...] = (mm(h, w3_ref) + b3_ref[...]).astype(o_ref.dtype)


def _vmem_estimate_bytes(tb, latent_dim, hidden, out_cols, act_itemsize):
    """Lane-padded VMEM footprint estimate for one grid step (double-buffered)."""
    zl = _round_up(latent_dim, LANE)
    hl = _round_up(hidden, LANE)
    ol = _round_up(out_cols, LANE)
    tiles = 2 * tb * zl * act_itemsize + 2 * tb * ol * 4     # streamed z + out
    temps = tb * hl * 4 + tb * ol * 4                        # activation temps
    weights = (zl * hl + hl * hl + hl * ol) * act_itemsize + 3 * hl * 4
    return tiles + temps + weights


def generator_forward(z, params, *, block_batch=2048, matmul_dtype=jnp.float32):
    """z: (batch, latent_dim) f32 -> (batch, output_dim) f32.

    params = (w1, b1, w2, b2, w3, b3) with weights stored (in, out) and biases
    (1, out), i.e. y = x @ W + b (equivalent to PyTorch's x @ W_pt.T + b).
    """
    w1, b1, w2, b2, w3, b3 = params
    batch, latent_dim = z.shape
    hidden = w1.shape[1]
    output_dim = w3.shape[1]

    # --- reduced-precision path: cast at the HBM boundary --------------------
    if matmul_dtype != jnp.float32:
        z = z.astype(matmul_dtype)
        w1 = w1.astype(matmul_dtype)
        w2 = w2.astype(matmul_dtype)
        w3 = w3.astype(matmul_dtype)
    act_itemsize = jnp.dtype(matmul_dtype).itemsize

    # --- conditional lane-dense output padding --------------------------------
    # Only pad when output_dim is already large and the pad fraction is small;
    # for small outputs the masked vst is far cheaper than 4x write inflation
    # plus an extra slice pass.
    out_pad = _round_up(output_dim, LANE)
    use_out_pad = (output_dim >= LANE) and (out_pad - output_dim) * 100 <= 15 * out_pad
    if use_out_pad and out_pad != output_dim:
        w3 = jnp.pad(w3, ((0, 0), (0, out_pad - output_dim)))
        b3 = jnp.pad(b3, ((0, 0), (0, out_pad - output_dim)))
        out_cols = out_pad
    else:
        out_cols = output_dim

    # --- batch tiling (no jnp.pad: ragged last block is masked by Pallas) -----
    tb = min(block_batch, batch)
    if tb < batch:
        tb = min(_round_up(tb, SUBLANE), batch)
    # Keep >= 2 grid steps so v7x's two TensorCores both get work (harmless on
    # single-core v5e/v6e).
    if pl.cdiv(batch, tb) < 2 and batch >= 2 * SUBLANE:
        tb = _round_up(pl.cdiv(batch, 2), SUBLANE)
    grid = (pl.cdiv(batch, tb),)

    # --- VMEM budget: raise scoped limit only if the tile actually needs it ---
    vmem_need = _vmem_estimate_bytes(tb, latent_dim, hidden, out_cols, act_itemsize)
    vmem_limit = None
    if vmem_need > 32 * 1024 * 1024:
        vmem_limit = min(int(vmem_need * 3 // 2), 96 * 1024 * 1024)

    def _resident(shape):
        # Full-shape block, same block every step -> stays VMEM-resident.
        return pl.BlockSpec(shape, lambda i: (0, 0))

    # Advisory cost: HBM-bound (activation read/write dominates traffic).
    flops = 2 * batch * (latent_dim * hidden + hidden * hidden + hidden * out_cols)
    bytes_accessed = (
        batch * latent_dim * act_itemsize                       # z read
        + batch * out_cols * 4                                  # out write
        + (latent_dim * hidden + hidden * hidden + hidden * out_cols) * act_itemsize
        + (2 * hidden + out_cols) * 4                           # biases (f32)
    )
    cost = pl.CostEstimate(flops=flops, transcendentals=0, bytes_accessed=bytes_accessed)

    out = pl.pallas_call(
        _generator_kernel,
        out_shape=jax.ShapeDtypeStruct((batch, out_cols), jnp.float32),
        grid=grid,
        in_specs=[
            pl.BlockSpec((tb, latent_dim), lambda i: (i, 0)),   # z tile (streamed)
            _resident((latent_dim, hidden)),                    # w1
            _resident((1, hidden)),                             # b1 (f32)
            _resident((hidden, hidden)),                        # w2
            _resident((1, hidden)),                             # b2 (f32)
            _resident((hidden, out_cols)),                      # w3
            _resident((1, out_cols)),                           # b3 (f32)
        ],
        out_specs=pl.BlockSpec((tb, out_cols), lambda i: (i, 0)),
        compiler_params=pltpu.CompilerParams(
            dimension_semantics=("parallel",),
            vmem_limit_bytes=vmem_limit,
        ),
        cost_estimate=cost,
    )(z, w1, b1, w2, b2, w3, b3)

    if out_cols != output_dim:
        out = out[:, :output_dim]
    return out


def init_params(key, latent_dim, output_dim):
    """Deterministic synthetic params matching the nn.Linear shapes.

    Weights stored transposed relative to PyTorch ((in, out) instead of
    (out, in)); biases kept 2D (1, out) so they broadcast cleanly in-kernel.
    """
    k1, k2, k3, k4, k5, k6 = jax.random.split(key, 6)
    w1 = jax.random.normal(k1, (latent_dim, HIDDEN_DIM), jnp.float32) * 0.1
    b1 = jax.random.normal(k2, (1, HIDDEN_DIM), jnp.float32) * 0.01
    w2 = jax.random.normal(k3, (HIDDEN_DIM, HIDDEN_DIM), jnp.float32) * 0.1
    b2 = jax.random.normal(k4, (1, HIDDEN_DIM), jnp.float32) * 0.01
    w3 = jax.random.normal(k5, (HIDDEN_DIM, output_dim), jnp.float32) * 0.1
    b3 = jax.random.normal(k6, (1, output_dim), jnp.float32) * 0.01
    return (w1, b1, w2, b2, w3, b3)


def reference_forward(z, params):
    w1, b1, w2, b2, w3, b3 = params
    h = z @ w1 + b1
    h = jnp.where(h > 0, h, NEG_SLOPE * h)
    h = h @ w2 + b2
    h = jnp.where(h > 0, h, NEG_SLOPE * h)
    return h @ w3 + b3


if __name__ == "__main__":
    # Small shapes; batch=200 with tile 128 -> 2 grid steps, exercising the
    # ragged (masked) last block and the multi-step / megacore-friendly path.
    batch = 200
    latent_dim = 16
    output_dim = 32

    key = jax.random.PRNGKey(0)
    kz, kp = jax.random.split(key)

    z = jax.random.normal(kz, (batch, latent_dim), jnp.float32)
    params = init_params(kp, latent_dim, output_dim)
    ref = reference_forward(z, params)

    # f32 path: matches the PyTorch module numerically.
    out = generator_forward(z, params, block_batch=128, matmul_dtype=jnp.float32)
    out = jax.block_until_ready(out)
    assert out.shape == (batch, output_dim)
    assert jnp.allclose(out, ref, atol=1e-5, rtol=1e-5)

    # bf16-MXU path: weights/z cast at the HBM boundary, f32 accumulation.
    out_bf16 = generator_forward(z, params, block_batch=128, matmul_dtype=jnp.bfloat16)
    out_bf16 = jax.block_until_ready(out_bf16)
    assert out_bf16.shape == (batch, output_dim)
    assert jnp.allclose(out_bf16, ref, atol=5e-2, rtol=5e-2)

    print("KERNEL_OK")
</pallas_src>

<mosaic_0001>
module attributes {stable_mosaic.version = 11 : i64} {
  func.func @_generator_kernel(%arg0: i32, %arg1: memref<128x16xf32, #tpu.memory_space<vmem>>, %arg2: memref<16x64xf32, #tpu.memory_space<vmem>>, %arg3: memref<1x64xf32, #tpu.memory_space<vmem>>, %arg4: memref<64x64xf32, #tpu.memory_space<vmem>>, %arg5: memref<1x64xf32, #tpu.memory_space<vmem>>, %arg6: memref<64x32xf32, #tpu.memory_space<vmem>>, %arg7: memref<1x32xf32, #tpu.memory_space<vmem>>, %arg8: memref<128x32xf32, #tpu.memory_space<vmem>>) attributes {dimension_semantics = [#tpu.dimension_semantics<parallel>], iteration_bounds = array<i64: 2>, scalar_prefetch = 0 : i64, scratch_operands = 0 : i64, tpu.core_type = #tpu.core_type<tc>, window_params = [{transform_indices = @transform_0, window_bounds = array<i64: 128, 16>}, {pipeline_mode = #tpu.pipeline_mode<synchronous>, transform_indices = @transform_1, window_bounds = array<i64: 16, 64>}, {pipeline_mode = #tpu.pipeline_mode<synchronous>, transform_indices = @transform_2, window_bounds = array<i64: 1, 64>}, {pipeline_mode = #tpu.pipeline_mode<synchronous>, transform_indices = @transform_3, window_bounds = array<i64: 64, 64>}, {pipeline_mode = #tpu.pipeline_mode<synchronous>, transform_indices = @transform_4, window_bounds = array<i64: 1, 64>}, {pipeline_mode = #tpu.pipeline_mode<synchronous>, transform_indices = @transform_5, window_bounds = array<i64: 64, 32>}, {pipeline_mode = #tpu.pipeline_mode<synchronous>, transform_indices = @transform_6, window_bounds = array<i64: 1, 32>}, {transform_indices = @transform_7, window_bounds = array<i64: 128, 32>}]} {
    %c0 = arith.constant 0 : index
    %c0_0 = arith.constant 0 : index
    %0 = vector.load %arg1[%c0, %c0_0] : memref<128x16xf32, #tpu.memory_space<vmem>>, vector<128x16xf32>
    %c0_1 = arith.constant 0 : index
    %c0_2 = arith.constant 0 : index
    %1 = vector.load %arg2[%c0_1, %c0_2] : memref<16x64xf32, #tpu.memory_space<vmem>>, vector<16x64xf32>
    %cst = arith.constant dense<0.000000e+00> : vector<128x64xf32>
    %2 = tpu.matmul %0, %1, %cst {dimension_numbers = #tpu.dot_dimension_numbers<[1], [0], [0], [1], [0, 0, 1, 1], [], []>} : vector<128x16xf32>, vector<16x64xf32>, vector<128x64xf32> -> vector<128x64xf32>
    %c0_3 = arith.constant 0 : index
    %c0_4 = arith.constant 0 : index
    %3 = vector.load %arg3[%c0_3, %c0_4] : memref<1x64xf32, #tpu.memory_space<vmem>>, vector<1x64xf32>
    %4 = vector.broadcast %3 : vector<1x64xf32> to vector<128x64xf32>
    %5 = arith.addf %2, %4 : vector<128x64xf32>
    %cst_5 = arith.constant 2.000000e-01 : f32
    %6 = vector.broadcast %cst_5 : f32 to vector<128x64xf32>
    %7 = arith.mulf %6, %5 : vector<128x64xf32>
    %8 = arith.maximumf %5, %7 : vector<128x64xf32>
    %c0_6 = arith.constant 0 : index
    %c0_7 = arith.constant 0 : index
    %9 = vector.load %arg4[%c0_6, %c0_7] : memref<64x64xf32, #tpu.memory_space<vmem>>, vector<64x64xf32>
    %cst_8 = arith.constant dense<0.000000e+00> : vector<128x64xf32>
    %10 = tpu.matmul %8, %9, %cst_8 {dimension_numbers = #tpu.dot_dimension_numbers<[1], [0], [0], [1], [0, 0, 1, 1], [], []>} : vector<128x64xf32>, vector<64x64xf32>, vector<128x64xf32> -> vector<128x64xf32>
    %c0_9 = arith.constant 0 : index
    %c0_10 = arith.constant 0 : index
    %11 = vector.load %arg5[%c0_9, %c0_10] : memref<1x64xf32, #tpu.memory_space<vmem>>, vector<1x64xf32>
    %12 = vector.broadcast %11 : vector<1x64xf32> to vector<128x64xf32>
    %13 = arith.addf %10, %12 : vector<128x64xf32>
    %cst_11 = arith.constant 2.000000e-01 : f32
    %14 = vector.broadcast %cst_11 : f32 to vector<128x64xf32>
    %15 = arith.mulf %14, %13 : vector<128x64xf32>
    %16 = arith.maximumf %13, %15 : vector<128x64xf32>
    %c0_12 = arith.constant 0 : index
    %c0_13 = arith.constant 0 : index
    %17 = vector.load %arg6[%c0_12, %c0_13] : memref<64x32xf32, #tpu.memory_space<vmem>>, vector<64x32xf32>
    %cst_14 = arith.constant dense<0.000000e+00> : vector<128x32xf32>
    %18 = tpu.matmul %16, %17, %cst_14 {dimension_numbers = #tpu.dot_dimension_numbers<[1], [0], [0], [1], [0, 0, 1, 1], [], []>} : vector<128x64xf32>, vector<64x32xf32>, vector<128x32xf32> -> vector<128x32xf32>
    %c0_15 = arith.constant 0 : index
    %c0_16 = arith.constant 0 : index
    %19 = vector.load %arg7[%c0_15, %c0_16] : memref<1x32xf32, #tpu.memory_space<vmem>>, vector<1x32xf32>
    %20 = vector.broadcast %19 : vector<1x32xf32> to vector<128x32xf32>
    %21 = arith.addf %18, %20 : vector<128x32xf32>
    %c0_17 = arith.constant 0 : index
    %c0_18 = arith.constant 0 : index
    %22 = vector.load %arg8[%c0_17, %c0_18] : memref<128x32xf32, #tpu.memory_space<vmem>>, vector<128x32xf32>
    tpu.vector_store %arg8[%c0_17, %c0_18], %21 {strides = array<i32>} : memref<128x32xf32, #tpu.memory_space<vmem>>, vector<128x32xf32>,
    return
  }
  func.func @transform_0(%arg0: i32) -> (i32, i32) {
    %c0_i32 = arith.constant 0 : i32
    %c0_i32_0 = arith.constant 0 : i32
    return %arg0, %c0_i32 : i32, i32
  }
  func.func @transform_1(%arg0: i32) -> (i32, i32) {
    %c0_i32 = arith.constant 0 : i32
    %c0_i32_0 = arith.constant 0 : i32
    %c0_i32_1 = arith.constant 0 : i32
    return %c0_i32, %c0_i32_0 : i32, i32
  }
  func.func @transform_2(%arg0: i32) -> (i32, i32) {
    %c0_i32 = arith.constant 0 : i32
    %c0_i32_0 = arith.constant 0 : i32
    %c0_i32_1 = arith.constant 0 : i32
    return %c0_i32, %c0_i32_0 : i32, i32
  }
  func.func @transform_3(%arg0: i32) -> (i32, i32) {
    %c0_i32 = arith.constant 0 : i32
    %c0_i32_0 = arith.constant 0 : i32
    %c0_i32_1 = arith.constant 0 : i32
    return %c0_i32, %c0_i32_0 : i32, i32
  }
  func.func @transform_4(%arg0: i32) -> (i32, i32) {
    %c0_i32 = arith.constant 0 : i32
    %c0_i32_0 = arith.constant 0 : i32
    %c0_i32_1 = arith.constant 0 : i32
    return %c0_i32, %c0_i32_0 : i32, i32
  }
  func.func @transform_5(%arg0: i32) -> (i32, i32) {
    %c0_i32 = arith.constant 0 : i32
    %c0_i32_0 = arith.constant 0 : i32
    %c0_i32_1 = arith.constant 0 : i32
    return %c0_i32, %c0_i32_0 : i32, i32
  }
  func.func @transform_6(%arg0: i32) -> (i32, i32) {
    %c0_i32 = arith.constant 0 : i32
    %c0_i32_0 = arith.constant 0 : i32
    %c0_i32_1 = arith.constant 0 : i32
    return %c0_i32, %c0_i32_0 : i32, i32
  }
  func.func @transform_7(%arg0: i32) -> (i32, i32) {
    %c0_i32 = arith.constant 0 : i32
    %c0_i32_0 = arith.constant 0 : i32
    return %arg0, %c0_i32 : i32, i32
  }
}

</mosaic_0001>

<llo_original>
// kernel: tpu_custom_call.1
$region0: #{tpu_custom_call.1}
  #allocation0 [shape = 'u32[]', space=smem, size = 0x4, offset = 0x4, fixed_abs, tag = 'smem constant byte address 0x4 - core index']
  #allocation1 [shape = 'u32[72,128]{1,0:T(1,128)}', space=vmem, size = 0x9000, scoped, tag = 'internal scratch']
  %s0 = inlined_call_operand.vmem [shape: f32[200,16], index: 0, kind: input, shape index: {}]
  %s1 = inlined_call_operand.vmem [shape: f32[16,64], index: 1, kind: input, shape index: {}]
  %s2 = inlined_call_operand.vmem [shape: f32[1,64], index: 2, kind: input, shape index: {}]
  %s3 = inlined_call_operand.vmem [shape: f32[64,64], index: 3, kind: input, shape index: {}]
  %s4 = inlined_call_operand.vmem [shape: f32[1,64], index: 4, kind: input, shape index: {}]
  %s5 = inlined_call_operand.vmem [shape: f32[64,32], index: 5, kind: input, shape index: {}]
  %s6 = inlined_call_operand.vmem [shape: f32[1,32], index: 6, kind: input, shape index: {}]
  %s7 = inlined_call_operand.vmem [shape: f32[200,32], index: 7, kind: output, shape index: {}]
  %s8 = sld [smem:[#allocation0]]
  $region109: #{tpu_custom_call.1} parent=0
    _
  %s10 = ssub.s32 1, %s8
  %s11 = scalar_select 0, %s10, %s8
  $region1: #{tpu_custom_call.1} parent=0
    #allocation2 [shape = 'u8[131072]{0}', space=vmem, size = 0x20000, scoped, tag = 'output window, operand 0']
    loop: start=0, step=1, limit=4
    $region2: #{tpu_custom_call.1} parent=1 // loop_pre_header
      _
    $region3: #{tpu_custom_call.1} parent=1 // loop_header
      %s13 = sphi 0, %s17
      %p14 = scmp.ge.s32.totalorder %s13, 4
      %s23 = sphi 0, %s25
      %s26 = sphi 0, %s23
      %s27 = sphi 0, %s26
      %s43 = sphi 0, %s27
      %s47 = sphi 0, %s47
      %s49 = sphi 0, %s47
      %s50 = sphi 0, %s49
      %s64 = sphi 0, %s50
      %s68 = sphi 0, %s68
      %s70 = sphi 0, %s68
      %s71 = sphi 0, %s70
      %s85 = sphi 0, %s71
      %s89 = sphi 0, %s89
      %s91 = sphi 0, %s89
      %s92 = sphi 0, %s91
      %s106 = sphi 0, %s92
      %s110 = sphi 0, %s110
      %s112 = sphi 0, %s110
      %s113 = sphi 0, %s112
      %s127 = sphi 0, %s113
      %s131 = sphi 0, %s131
      %s133 = sphi 0, %s131
      %s134 = sphi 0, %s133
      %s148 = sphi 0, %s134
      %s152 = sphi 0, %s152
      %s154 = sphi 0, %s152
      %s155 = sphi 0, %s154
      %s169 = sphi 0, %s155
      %s175 = sphi 0, %s177
      %s178 = sphi 0, %s175
      %s179 = sphi 0, %s178
      %s195 = sphi 0, %s179
    $region4: #{tpu_custom_call.1} parent=1 // loop_header_branch
      %16 = sbr.rel (%p14) target = $region8
    $region5: #{tpu_custom_call.1} parent=1 // loop_body
      %s18 = ssub.s32 %s13, 1
      %s19 = ssub.s32 %s13, 2
      %s20 = sadd.s32 %s13, 1
      %s21 = ssub.s32 %s13, %s20
      %p22 = scmp.eq.s32.totalorder %s21, 0
      %s24 = sadd.s32 %s23, 1
      %s25 = scalar_select %p22, %s23, %s24
      %p28 = pneg %p22
      %p29 = scmp.eq.s32.totalorder %s13, 1
      %p30 = por %p28, %p29
      %p31 = scmp.ne.s32.totalorder %s23, %s26
      %p32 = scmp.eq.s32.totalorder %s13, 0
      %p33 = por %p31, %p32
      %p34 = scmp.ne.s32.totalorder %s23, %s26
      %p35 = scmp.eq.s32.totalorder %s18, 1
      %p36 = por %p34, %p35
      %p37 = scmp.ne.s32.totalorder %s26, %s27
      %p38 = scmp.eq.s32.totalorder %s18, 0
      %p39 = por %p37, %p38
      %p40 = scmp.ne.s32.totalorder %s26, %s27
      %p41 = scmp.eq.s32.totalorder %s19, 1
      %p42 = por %p40, %p41
      %p44 = scmp.ne.s32.totalorder %s27, %s43
      %p45 = scmp.eq.s32.totalorder %s19, 0
      %p46 = por %p44, %p45
      %s48 = sadd.s32 %s47, 1
      %p51 = scmp.eq.s32.totalorder %s13, 1
      %p52 = scmp.ne.s32.totalorder %s47, %s49
      %p53 = scmp.eq.s32.totalorder %s13, 0
      %p54 = por %p52, %p53
      %p55 = scmp.ne.s32.totalorder %s47, %s49
      %p56 = scmp.eq.s32.totalorder %s18, 1
      %p57 = por %p55, %p56
      %p58 = scmp.ne.s32.totalorder %s49, %s50
      %p59 = scmp.eq.s32.totalorder %s18, 0
      %p60 = por %p58, %p59
      %p61 = scmp.ne.s32.totalorder %s49, %s50
      %p62 = scmp.eq.s32.totalorder %s19, 1
      %p63 = por %p61, %p62
      %p65 = scmp.ne.s32.totalorder %s50, %s64
      %p66 = scmp.eq.s32.totalorder %s19, 0
      %p67 = por %p65, %p66
      %s69 = sadd.s32 %s68, 1
      %p72 = scmp.eq.s32.totalorder %s13, 1
      %p73 = scmp.ne.s32.totalorder %s68, %s70
      %p74 = scmp.eq.s32.totalorder %s13, 0
      %p75 = por %p73, %p74
      %p76 = scmp.ne.s32.totalorder %s68, %s70
      %p77 = scmp.eq.s32.totalorder %s18, 1
      %p78 = por %p76, %p77
      %p79 = scmp.ne.s32.totalorder %s70, %s71
      %p80 = scmp.eq.s32.totalorder %s18, 0
      %p81 = por %p79, %p80
      %p82 = scmp.ne.s32.totalorder %s70, %s71
      %p83 = scmp.eq.s32.totalorder %s19, 1
      %p84 = por %p82, %p83
      %p86 = scmp.ne.s32.totalorder %s71, %s85
      %p87 = scmp.eq.s32.totalorder %s19, 0
      %p88 = por %p86, %p87
      %s90 = sadd.s32 %s89, 1
      %p93 = scmp.eq.s32.totalorder %s13, 1
      %p94 = scmp.ne.s32.totalorder %s89, %s91
      %p95 = scmp.eq.s32.totalorder %s13, 0
      %p96 = por %p94, %p95
      %p97 = scmp.ne.s32.totalorder %s89, %s91
      %p98 = scmp.eq.s32.totalorder %s18, 1
      %p99 = por %p97, %p98
      %p100 = scmp.ne.s32.totalorder %s91, %s92
      %p101 = scmp.eq.s32.totalorder %s18, 0
      %p102 = por %p100, %p101
      %p103 = scmp.ne.s32.totalorder %s91, %s92
      %p104 = scmp.eq.s32.totalorder %s19, 1
      %p105 = por %p103, %p104
      %p107 = scmp.ne.s32.totalorder %s92, %s106
      %p108 = scmp.eq.s32.totalorder %s19, 0
      %p109 = por %p107, %p108
      %s111 = sadd.s32 %s110, 1
      %p114 = scmp.eq.s32.totalorder %s13, 1
      %p115 = scmp.ne.s32.totalorder %s110, %s112
      %p116 = scmp.eq.s32.totalorder %s13, 0
      %p117 = por %p115, %p116
      %p118 = scmp.ne.s32.totalorder %s110, %s112
      %p119 = scmp.eq.s32.totalorder %s18, 1
      %p120 = por %p118, %p119
      %p121 = scmp.ne.s32.totalorder %s112, %s113
      %p122 = scmp.eq.s32.totalorder %s18, 0
      %p123 = por %p121, %p122
      %p124 = scmp.ne.s32.totalorder %s112, %s113
      %p125 = scmp.eq.s32.totalorder %s19, 1
      %p126 = por %p124, %p125
      %p128 = scmp.ne.s32.totalorder %s113, %s127
      %p129 = scmp.eq.s32.totalorder %s19, 0
      %p130 = por %p128, %p129
      %s132 = sadd.s32 %s131, 1
      %p135 = scmp.eq.s32.totalorder %s13, 1
      %p136 = scmp.ne.s32.totalorder %s131, %s133
      %p137 = scmp.eq.s32.totalorder %s13, 0
      %p138 = por %p136, %p137
      %p139 = scmp.ne.s32.totalorder %s131, %s133
      %p140 = scmp.eq.s32.totalorder %s18, 1
      %p141 = por %p139, %p140
      %p142 = scmp.ne.s32.totalorder %s133, %s134
      %p143 = scmp.eq.s32.totalorder %s18, 0
      %p144 = por %p142, %p143
      %p145 = scmp.ne.s32.totalorder %s133, %s134
      %p146 = scmp.eq.s32.totalorder %s19, 1
      %p147 = por %p145, %p146
      %p149 = scmp.ne.s32.totalorder %s134, %s148
      %p150 = scmp.eq.s32.totalorder %s19, 0
      %p151 = por %p149, %p150
      %s153 = sadd.s32 %s152, 1
      %p156 = scmp.eq.s32.totalorder %s13, 1
      %p157 = scmp.ne.s32.totalorder %s152, %s154
      %p158 = scmp.eq.s32.totalorder %s13, 0
      %p159 = por %p157, %p158
      %p160 = scmp.ne.s32.totalorder %s152, %s154
      %p161 = scmp.eq.s32.totalorder %s18, 1
      %p162 = por %p160, %p161
      %p163 = scmp.ne.s32.totalorder %s154, %s155
      %p164 = scmp.eq.s32.totalorder %s18, 0
      %p165 = por %p163, %p164
      %p166 = scmp.ne.s32.totalorder %s154, %s155
      %p167 = scmp.eq.s32.totalorder %s19, 1
      %p168 = por %p166, %p167
      %p170 = scmp.ne.s32.totalorder %s155, %s169
      %p171 = scmp.eq.s32.totalorder %s19, 0
      %p172 = por %p170, %p171
      %s173 = ssub.s32 %s13, %s20
      %p174 = scmp.eq.s32.totalorder %s173, 0
      %s176 = sadd.s32 %s175, 1
      %s177 = scalar_select %p174, %s175, %s176
      %p180 = pneg %p174
      %p181 = scmp.eq.s32.totalorder %s13, 1
      %p182 = por %p180, %p181
      %p183 = scmp.ne.s32.totalorder %s175, %s178
      %p184 = scmp.eq.s32.totalorder %s13, 0
      %p185 = por %p183, %p184
      %p186 = scmp.ne.s32.totalorder %s175, %s178
      %p187 = scmp.eq.s32.totalorder %s18, 1
      %p188 = por %p186, %p187
      %p189 = scmp.ne.s32.totalorder %s178, %s179
      %p190 = scmp.eq.s32.totalorder %s18, 0
      %p191 = por %p189, %p190
      %p192 = scmp.ne.s32.totalorder %s178, %s179
      %p193 = scmp.eq.s32.totalorder %s19, 1
      %p194 = por %p192, %p193
      %p196 = scmp.ne.s32.totalorder %s179, %s195
      %p197 = scmp.eq.s32.totalorder %s19, 0
      %p198 = por %p196, %p197
      %p199 = scmp.le.s32.totalorder 1, %s13
      %p200 = scmp.lt.s32.totalorder %s13, 3
      %p201 = pnand %p199, %p200
      %p202 = pneg %p201
      // Predicated region
      $region9: #{tpu_custom_call.1} parent=5 // pred_check
        _
      $region10: #{tpu_custom_call.1} parent=5 // pred_check_branch
        %204 = sbr.rel (%p201) target = $region12
      $region11: #{tpu_custom_call.1} parent=5 // pred_region
        %s205 = ssub.s32 %s13, 1
        // Predicated region
        $region13: #{tpu_custom_call.1} parent=11 // pred_check
          %p206 = pneg %p60
        $region14: #{tpu_custom_call.1} parent=11 // pred_check_branch
          %208 = sbr.rel (%p206) target = $region16
        $region15: #{tpu_custom_call.1} parent=11 // pred_region
          _
        $region16: #{tpu_custom_call.1} parent=11 // pred_fallthru
          _
        // Predicated region
        $region17: #{tpu_custom_call.1} parent=11 // pred_check
          %p209 = pneg %p81
        $region18: #{tpu_custom_call.1} parent=11 // pred_check_branch
          %211 = sbr.rel (%p209) target = $region20
        $region19: #{tpu_custom_call.1} parent=11 // pred_region
          _
        $region20: #{tpu_custom_call.1} parent=11 // pred_fallthru
          _
        // Predicated region
        $region21: #{tpu_custom_call.1} parent=11 // pred_check
          %p212 = pneg %p102
        $region22: #{tpu_custom_call.1} parent=11 // pred_check_branch
          %214 = sbr.rel (%p212) target = $region24
        $region23: #{tpu_custom_call.1} parent=11 // pred_region
          _
        $region24: #{tpu_custom_call.1} parent=11 // pred_fallthru
          _
        // Predicated region
        $region25: #{tpu_custom_call.1} parent=11 // pred_check
          %p215 = pneg %p123
        $region26: #{tpu_custom_call.1} parent=11 // pred_check_branch
          %217 = sbr.rel (%p215) target = $region28
        $region27: #{tpu_custom_call.1} parent=11 // pred_region
          _
        $region28: #{tpu_custom_call.1} parent=11 // pred_fallthru
          _
        // Predicated region
        $region29: #{tpu_custom_call.1} parent=11 // pred_check
          %p218 = pneg %p144
        $region30: #{tpu_custom_call.1} parent=11 // pred_check_branch
          %220 = sbr.rel (%p218) target = $region32
        $region31: #{tpu_custom_call.1} parent=11 // pred_region
          _
        $region32: #{tpu_custom_call.1} parent=11 // pred_fallthru
          _
        // Predicated region
        $region33: #{tpu_custom_call.1} parent=11 // pred_check
          %p221 = pneg %p165
        $region34: #{tpu_custom_call.1} parent=11 // pred_check_branch
          %223 = sbr.rel (%p221) target = $region36
        $region35: #{tpu_custom_call.1} parent=11 // pred_region
          _
        $region36: #{tpu_custom_call.1} parent=11 // pred_fallthru
          _
      $region12: #{tpu_custom_call.1} parent=5 // pred_fallthru
        _
      %p224 = scmp.lt.s32.totalorder %s13, 2
      // Predicated region
      $region37: #{tpu_custom_call.1} parent=5 // pred_check
        %p225 = pneg %p224
      $region38: #{tpu_custom_call.1} parent=5 // pred_check_branch
        %227 = sbr.rel (%p225) target = $region40
      $region39: #{tpu_custom_call.1} parent=5 // pred_region
        // Predicated region
        $region41: #{tpu_custom_call.1} parent=39 // pred_check
          %p228 = pneg %p33
        $region42: #{tpu_custom_call.1} parent=39 // pred_check_branch
          %230 = sbr.rel (%p228) target = $region44
        $region43: #{tpu_custom_call.1} parent=39 // pred_region
          %s231 = smul.u32 16, %s13
          %s232 = ssub.s32 25, %s231
          %p233 = scmp.lt.s32.totalorder %s232, 16
          %s234 = scalar_select %p233, %s232, 16
          %s235 = smul.u32 8, %s234
          %p236 = scmp.lt.s32.totalorder %s231, 24
          %s237 = scalar_select %p236, %s231, 24
          %s238 = smul.addr %s237, 8
          %s239 = scalar_lea.vmem %s0, %s238
          %s240 = smul.u32 16, %s13
          %s241 = ssub.s32 25, %s240
          %p242 = scmp.lt.s32.totalorder %s241, 16
          %s243 = scalar_select %p242, %s241, 16
          %s244 = smul.u32 8, %s243
        $region44: #{tpu_custom_call.1} parent=39 // pred_fallthru
          _
      $region40: #{tpu_custom_call.1} parent=5 // pred_fallthru
        _
      %p245 = scmp.le.s32.totalorder 1, %s13
      %p246 = scmp.lt.s32.totalorder %s13, 3
      %p247 = pnand %p245, %p246
      %p248 = pneg %p247
      // Predicated region
      $region45: #{tpu_custom_call.1} parent=5 // pred_check
        _
      $region46: #{tpu_custom_call.1} parent=5 // pred_check_branch
        %250 = sbr.rel (%p247) target = $region48
      $region47: #{tpu_custom_call.1} parent=5 // pred_region
        %s251 = ssub.s32 %s13, 1
        %s252 = smul.u32 16, %s18
        %s253 = ssub.s32 25, %s252
        %p254 = scmp.lt.s32.totalorder %s253, 16
        %s255 = scalar_select %p254, %s253, 16
        %s256 = smul.u32 8, %s255
        %p257 = scmp.lt.s32.totalorder %s252, 24
        %s258 = scalar_select %p257, %s252, 24
        %s259 = smul.addr %s258, 8
        %s260 = scalar_lea.vmem %s0, %s259
        %p261 = pneg %p39
        %p262 = pneg %p36
        %p263 = pneg %p60
        %p264 = pneg %p57
        %p265 = pneg %p81
        %p266 = pneg %p78
        %p267 = pneg %p102
        %p268 = pneg %p99
        %p269 = pneg %p123
        %p270 = pneg %p120
        %p271 = pneg %p144
        %p272 = pneg %p141
        %p273 = pneg %p165
        %p274 = pneg %p162
        %p275 = pneg %p191
        %p276 = pneg %p188
        %s277 = sand.u32 %s178, 1
        %s278 = sand.u32 %s178, 1
        %s279 = smul.addr %s278, 128
        %s280 = scalar_lea.vmem [#allocation2], %s279
        %s281 = smul.u32 16, %s18
        %s282 = ssub.s32 25, %s281
        %p283 = scmp.lt.s32.totalorder %s282, 16
        %s284 = scalar_select %p283, %s282, 16
        %s285 = smul.u32 8, %s284
        %p286 = scmp.lt.s32.totalorder %s281, 24
        %s287 = scalar_select %p286, %s281, 24
        %s288 = smul.addr %s287, 8
        %s289 = scalar_lea.vmem %s0, %s288
        %s290 = smul.u32 16, %s18
        %s291 = ssub.s32 25, %s290
        %p292 = scmp.lt.s32.totalorder %s291, 16
        %s293 = scalar_select %p292, %s291, 16
        %s294 = smul.u32 8, %s293
        %s295 = smul.u32 16, %s18
        %s296 = ssub.s32 25, %s295
        %p297 = scmp.lt.s32.totalorder %s296, 16
        %s298 = scalar_select %p297, %s296, 16
        %s299 = smul.u32 8, %s298
        %v300 = vld [vmem:[%s289] sm:$0xff]
        %v301 = vld [vmem:[%s289 + $0x8] sm:$0xff]
        %v302 = vld [vmem:[%s289 + $0x10] sm:$0xff]
        %v303 = vld [vmem:[%s289 + $0x18] sm:$0xff]
        %v304 = vld [vmem:[%s289 + $0x20] sm:$0xff]
        %v305 = vld [vmem:[%s289 + $0x28] sm:$0xff]
        %v306 = vld [vmem:[%s289 + $0x30] sm:$0xff]
        %v307 = vld [vmem:[%s289 + $0x38] sm:$0xff]
        %v308 = vld [vmem:[%s289 + $0x40] sm:$0xff]
        %v309 = vld [vmem:[%s289 + $0x48] sm:$0xff]
        %v310 = vld [vmem:[%s289 + $0x50] sm:$0xff]
        %v311 = vld [vmem:[%s289 + $0x58] sm:$0xff]
        %v312 = vld [vmem:[%s289 + $0x60] sm:$0xff]
        %v313 = vld [vmem:[%s289 + $0x68] sm:$0xff]
        %v314 = vld [vmem:[%s289 + $0x70] sm:$0xff]
        %v315 = vld [vmem:[%s289 + $0x78] sm:$0xff]
        %v316 = vld [vmem:[%s1] sm:$0xff]
        %v317 = vld [vmem:[%s1 + $0x8] sm:$0xff]
        %v318 = vld [vmem:[%s2] sm:$0x1]
        %v320 = vperm.slane %v318, 0
        %vm322 = vcmask 130048
        %v324 = vsel %vm322, %v300, 0
        %v327 = vsel %vm322, %v301, 0
        %v330 = vsel %vm322, %v302, 0
        %v333 = vsel %vm322, %v303, 0
        %v336 = vsel %vm322, %v304, 0
        %v339 = vsel %vm322, %v305, 0
        %v342 = vsel %vm322, %v306, 0
        %v345 = vsel %vm322, %v307, 0
        %v348 = vsel %vm322, %v308, 0
        %v351 = vsel %vm322, %v309, 0
        %v354 = vsel %vm322, %v310, 0
        %v357 = vsel %vm322, %v311, 0
        %v360 = vsel %vm322, %v312, 0
        %v363 = vsel %vm322, %v313, 0
        %v366 = vsel %vm322, %v314, 0
        %v369 = vsel %vm322, %v315, 0
        %371 = vmatpush.msra.mxu0 0.0
        %372 = vmatpush.msra.mxu0 0.0
        %373 = vmatpush.msra.mxu0 0.0
        %374 = vmatpush.msra.mxu0 0.0
        %375 = vmatpush.msra.mxu0 0.0
        %376 = vmatpush.msra.mxu0 0.0
        %377 = vmatpush.msra.mxu0 0.0
        %378 = vmatpush.msra.mxu0 0.0
        %379 = vmatpush.msra.mxu0 0.0
        %380 = vmatpush.msra.mxu0 0.0
        %381 = vmatpush.msra.mxu0 0.0
        %382 = vmatpush.msra.mxu0 0.0
        %383 = vmatpush.msra.mxu0 0.0
        %384 = vmatpush.msra.mxu0 0.0
        %385 = vmatpush.msra.mxu0 %v317
        %386 = vmatpush.msra.mxu0 %v316
        %387 = vmatmul.f32.gmra.mxu0 %v324
        %v388 = vpop.f32.mrf.mxu0
        %v389 = vadd.f32 %v320, %v388
        %390 = vmatmul.f32.gmra.mxu0 %v327
        %v391 = vpop.f32.mrf.mxu0
        %v392 = vadd.f32 %v320, %v391
        %393 = vmatmul.f32.gmra.mxu0 %v330
        %v394 = vpop.f32.mrf.mxu0
        %v395 = vadd.f32 %v320, %v394
        %396 = vmatmul.f32.gmra.mxu0 %v333
        %v397 = vpop.f32.mrf.mxu0
        %v398 = vadd.f32 %v320, %v397
        %399 = vmatmul.f32.gmra.mxu0 %v336
        %v400 = vpop.f32.mrf.mxu0
        %v401 = vadd.f32 %v320, %v400
        %402 = vmatmul.f32.gmra.mxu0 %v339
        %v403 = vpop.f32.mrf.mxu0
        %v404 = vadd.f32 %v320, %v403
        %405 = vmatmul.f32.gmra.mxu0 %v342
        %v406 = vpop.f32.mrf.mxu0
        %v407 = vadd.f32 %v320, %v406
        %408 = vmatmul.f32.gmra.mxu0 %v345
        %v409 = vpop.f32.mrf.mxu0
        %v410 = vadd.f32 %v320, %v409
        %411 = vmatmul.f32.gmra.mxu0 %v348
        %v412 = vpop.f32.mrf.mxu0
        %v413 = vadd.f32 %v320, %v412
        %414 = vmatmul.f32.gmra.mxu0 %v351
        %v415 = vpop.f32.mrf.mxu0
        %v416 = vadd.f32 %v320, %v415
        %417 = vmatmul.f32.gmra.mxu0 %v354
        %v418 = vpop.f32.mrf.mxu0
        %v419 = vadd.f32 %v320, %v418
        %420 = vmatmul.f32.gmra.mxu0 %v357
        %v421 = vpop.f32.mrf.mxu0
        %v422 = vadd.f32 %v320, %v421
        %423 = vmatmul.f32.gmra.mxu0 %v360
        %v424 = vpop.f32.mrf.mxu0
        %v425 = vadd.f32 %v320, %v424
        %426 = vmatmul.f32.gmra.mxu0 %v363
        %v427 = vpop.f32.mrf.mxu0
        %v428 = vadd.f32 %v320, %v427
        %429 = vmatmul.f32.gmra.mxu0 %v366
        %v430 = vpop.f32.mrf.mxu0
        %v431 = vadd.f32 %v320, %v430
        %432 = vmatmul.f32.gmra.mxu0 %v369
        %v433 = vpop.f32.mrf.mxu0
        %v434 = vadd.f32 %v320, %v433
        %435 = vdwg.mxu0
        %v436 = vmul.f32 %v389, 0.2
        %v437 = vmul.f32 %v392, 0.2
        %v438 = vmul.f32 %v395, 0.2
        %v439 = vmul.f32 %v398, 0.2
        %v440 = vmul.f32 %v401, 0.2
        %v441 = vmul.f32 %v404, 0.2
        %v442 = vmul.f32 %v407, 0.2
        %v443 = vmul.f32 %v410, 0.2
        %v444 = vmul.f32 %v413, 0.2
        %v445 = vmul.f32 %v416, 0.2
        %v446 = vmul.f32 %v419, 0.2
        %v447 = vmul.f32 %v422, 0.2
        %v448 = vmul.f32 %v425, 0.2
        %v449 = vmul.f32 %v428, 0.2
        %v450 = vmul.f32 %v431, 0.2
        %v451 = vmul.f32 %v434, 0.2
        %v452 = vmax.f32 %v389, %v436
        %v453 = vmax.f32 %v392, %v437
        %v454 = vmax.f32 %v395, %v438
        %v455 = vmax.f32 %v398, %v439
        %v456 = vmax.f32 %v401, %v440
        %v457 = vmax.f32 %v404, %v441
        %v458 = vmax.f32 %v407, %v442
        %v459 = vmax.f32 %v410, %v443
        %v460 = vmax.f32 %v413, %v444
        %v461 = vmax.f32 %v416, %v445
        %v462 = vmax.f32 %v419, %v446
        %v463 = vmax.f32 %v422, %v447
        %v464 = vmax.f32 %v425, %v448
        %v465 = vmax.f32 %v428, %v449
        %v466 = vmax.f32 %v431, %v450
        %v467 = vmax.f32 %v434, %v451
        %v468 = vld [vmem:[%s3] sm:$0xff]
        %v469 = vld [vmem:[%s3 + $0x8] sm:$0xff]
        %v470 = vld [vmem:[%s3 + $0x10] sm:$0xff]
        %v471 = vld [vmem:[%s3 + $0x18] sm:$0xff]
        %v472 = vld [vmem:[%s3 + $0x20] sm:$0xff]
        %v473 = vld [vmem:[%s3 + $0x28] sm:$0xff]
        %v474 = vld [vmem:[%s3 + $0x30] sm:$0xff]
        %v475 = vld [vmem:[%s3 + $0x38] sm:$0xff]
        %v476 = vld [vmem:[%s4] sm:$0x1]
        %v478 = vperm.slane %v476, 0
        %vm480 = vcmask 523264
        %v482 = vsel %vm480, %v452, 0
        %v485 = vsel %vm480, %v453, 0
        %v488 = vsel %vm480, %v454, 0
        %v491 = vsel %vm480, %v455, 0
        %v494 = vsel %vm480, %v456, 0
        %v497 = vsel %vm480, %v457, 0
        %v500 = vsel %vm480, %v458, 0
        %v503 = vsel %vm480, %v459, 0
        %v506 = vsel %vm480, %v460, 0
        %v509 = vsel %vm480, %v461, 0
        %v512 = vsel %vm480, %v462, 0
        %v515 = vsel %vm480, %v463, 0
        %v518 = vsel %vm480, %v464, 0
        %v521 = vsel %vm480, %v465, 0
        %v524 = vsel %vm480, %v466, 0
        %v527 = vsel %vm480, %v467, 0
        %529 = vmatpush.msra.mxu0 0.0
        %530 = vmatpush.msra.mxu0 0.0
        %531 = vmatpush.msra.mxu0 0.0
        %532 = vmatpush.msra.mxu0 0.0
        %533 = vmatpush.msra.mxu0 0.0
        %534 = vmatpush.msra.mxu0 0.0
        %535 = vmatpush.msra.mxu0 0.0
        %536 = vmatpush.msra.mxu0 0.0
        %537 = vmatpush.msra.mxu0 %v475
        %538 = vmatpush.msra.mxu0 %v474
        %539 = vmatpush.msra.mxu0 %v473
        %540 = vmatpush.msra.mxu0 %v472
        %541 = vmatpush.msra.mxu0 %v471
        %542 = vmatpush.msra.mxu0 %v470
        %543 = vmatpush.msra.mxu0 %v469
        %544 = vmatpush.msra.mxu0 %v468
        %545 = vmatmul.f32.gmra.mxu0 %v482
        %v546 = vpop.f32.mrf.mxu0
        %v547 = vadd.f32 %v478, %v546
        %548 = vmatmul.f32.gmra.mxu0 %v485
        %v549 = vpop.f32.mrf.mxu0
        %v550 = vadd.f32 %v478, %v549
        %551 = vmatmul.f32.gmra.mxu0 %v488
        %v552 = vpop.f32.mrf.mxu0
        %v553 = vadd.f32 %v478, %v552
        %554 = vmatmul.f32.gmra.mxu0 %v491
        %v555 = vpop.f32.mrf.mxu0
        %v556 = vadd.f32 %v478, %v555
        %557 = vmatmul.f32.gmra.mxu0 %v494
        %v558 = vpop.f32.mrf.mxu0
        %v559 = vadd.f32 %v478, %v558
        %560 = vmatmul.f32.gmra.mxu0 %v497
        %v561 = vpop.f32.mrf.mxu0
        %v562 = vadd.f32 %v478, %v561
        %563 = vmatmul.f32.gmra.mxu0 %v500
        %v564 = vpop.f32.mrf.mxu0
        %v565 = vadd.f32 %v478, %v564
        %566 = vmatmul.f32.gmra.mxu0 %v503
        %v567 = vpop.f32.mrf.mxu0
        %v568 = vadd.f32 %v478, %v567
        %569 = vmatmul.f32.gmra.mxu0 %v506
        %v570 = vpop.f32.mrf.mxu0
        %v571 = vadd.f32 %v478, %v570
        %572 = vmatmul.f32.gmra.mxu0 %v509
        %v573 = vpop.f32.mrf.mxu0
        %v574 = vadd.f32 %v478, %v573
        %575 = vmatmul.f32.gmra.mxu0 %v512
        %v576 = vpop.f32.mrf.mxu0
        %v577 = vadd.f32 %v478, %v576
        %578 = vmatmul.f32.gmra.mxu0 %v515
        %v579 = vpop.f32.mrf.mxu0
        %v580 = vadd.f32 %v478, %v579
        %581 = vmatmul.f32.gmra.mxu0 %v518
        %v582 = vpop.f32.mrf.mxu0
        %v583 = vadd.f32 %v478, %v582
        %584 = vmatmul.f32.gmra.mxu0 %v521
        %v585 = vpop.f32.mrf.mxu0
        %v586 = vadd.f32 %v478, %v585
        %587 = vmatmul.f32.gmra.mxu0 %v524
        %v588 = vpop.f32.mrf.mxu0
        %v589 = vadd.f32 %v478, %v588
        %590 = vmatmul.f32.gmra.mxu0 %v527
        %v591 = vpop.f32.mrf.mxu0
        %v592 = vadd.f32 %v478, %v591
        %593 = vdwg.mxu0
        %v594 = vmul.f32 %v547, 0.2
        %v595 = vmul.f32 %v550, 0.2
        %v596 = vmul.f32 %v553, 0.2
        %v597 = vmul.f32 %v556, 0.2
        %v598 = vmul.f32 %v559, 0.2
        %v599 = vmul.f32 %v562, 0.2
        %v600 = vmul.f32 %v565, 0.2
        %v601 = vmul.f32 %v568, 0.2
        %v602 = vmul.f32 %v571, 0.2
        %v603 = vmul.f32 %v574, 0.2
        %v604 = vmul.f32 %v577, 0.2
        %v605 = vmul.f32 %v580, 0.2
        %v606 = vmul.f32 %v583, 0.2
        %v607 = vmul.f32 %v586, 0.2
        %v608 = vmul.f32 %v589, 0.2
        %v609 = vmul.f32 %v592, 0.2
        %v610 = vmax.f32 %v547, %v594
        %v611 = vmax.f32 %v550, %v595
        %v612 = vmax.f32 %v553, %v596
        %v613 = vmax.f32 %v556, %v597
        %v614 = vmax.f32 %v559, %v598
        %v615 = vmax.f32 %v562, %v599
        %v616 = vmax.f32 %v565, %v600
        %v617 = vmax.f32 %v568, %v601
        %v618 = vmax.f32 %v571, %v602
        %v619 = vmax.f32 %v574, %v603
        %v620 = vmax.f32 %v577, %v604
        %v621 = vmax.f32 %v580, %v605
        %v622 = vmax.f32 %v583, %v606
        %v623 = vmax.f32 %v586, %v607
        %v624 = vmax.f32 %v589, %v608
        %v625 = vmax.f32 %v592, %v609
        %v626 = vld [vmem:[%s5] sm:$0xff]
        %v627 = vld [vmem:[%s5 + $0x8] sm:$0xff]
        %v628 = vld [vmem:[%s5 + $0x10] sm:$0xff]
        %v629 = vld [vmem:[%s5 + $0x18] sm:$0xff]
        %v630 = vld [vmem:[%s5 + $0x20] sm:$0xff]
        %v631 = vld [vmem:[%s5 + $0x28] sm:$0xff]
        %v632 = vld [vmem:[%s5 + $0x30] sm:$0xff]
        %v633 = vld [vmem:[%s5 + $0x38] sm:$0xff]
        %v634 = vld [vmem:[%s6] sm:$0x1]
        %v636 = vperm.slane %v634, 0
        %v639 = vsel %vm480, %v610, 0
        %v642 = vsel %vm480, %v611, 0
        %v645 = vsel %vm480, %v612, 0
        %v648 = vsel %vm480, %v613, 0
        %v651 = vsel %vm480, %v614, 0
        %v654 = vsel %vm480, %v615, 0
        %v657 = vsel %vm480, %v616, 0
        %v660 = vsel %vm480, %v617, 0
        %v663 = vsel %vm480, %v618, 0
        %v666 = vsel %vm480, %v619, 0
        %v669 = vsel %vm480, %v620, 0
        %v672 = vsel %vm480, %v621, 0
        %v675 = vsel %vm480, %v622, 0
        %v678 = vsel %vm480, %v623, 0
        %v681 = vsel %vm480, %v624, 0
        %v684 = vsel %vm480, %v625, 0
        %686 = vmatpush.msra.mxu0 0.0
        %687 = vmatpush.msra.mxu0 0.0
        %688 = vmatpush.msra.mxu0 0.0
        %689 = vmatpush.msra.mxu0 0.0
        %690 = vmatpush.msra.mxu0 0.0
        %691 = vmatpush.msra.mxu0 0.0
        %692 = vmatpush.msra.mxu0 0.0
        %693 = vmatpush.msra.mxu0 0.0
        %694 = vmatpush.msra.mxu0 %v633
        %695 = vmatpush.msra.mxu0 %v632
        %696 = vmatpush.msra.mxu0 %v631
        %697 = vmatpush.msra.mxu0 %v630
        %698 = vmatpush.msra.mxu0 %v629
        %699 = vmatpush.msra.mxu0 %v628
        %700 = vmatpush.msra.mxu0 %v627
        %701 = vmatpush.msra.mxu0 %v626
        %702 = vmatmul.f32.gmra.mxu0 %v639
        %v703 = vpop.f32.mrf.mxu0
        %v704 = vadd.f32 %v636, %v703
        %705 = vmatmul.f32.gmra.mxu0 %v642
        %v706 = vpop.f32.mrf.mxu0
        %v707 = vadd.f32 %v636, %v706
        %708 = vmatmul.f32.gmra.mxu0 %v645
        %v709 = vpop.f32.mrf.mxu0
        %v710 = vadd.f32 %v636, %v709
        %711 = vmatmul.f32.gmra.mxu0 %v648
        %v712 = vpop.f32.mrf.mxu0
        %v713 = vadd.f32 %v636, %v712
        %714 = vmatmul.f32.gmra.mxu0 %v651
        %v715 = vpop.f32.mrf.mxu0
        %v716 = vadd.f32 %v636, %v715
        %717 = vmatmul.f32.gmra.mxu0 %v654
        %v718 = vpop.f32.mrf.mxu0
        %v719 = vadd.f32 %v636, %v718
        %720 = vmatmul.f32.gmra.mxu0 %v657
        %v721 = vpop.f32.mrf.mxu0
        %v722 = vadd.f32 %v636, %v721
        %723 = vmatmul.f32.gmra.mxu0 %v660
        %v724 = vpop.f32.mrf.mxu0
        %v725 = vadd.f32 %v636, %v724
        %726 = vmatmul.f32.gmra.mxu0 %v663
        %v727 = vpop.f32.mrf.mxu0
        %v728 = vadd.f32 %v636, %v727
        %729 = vmatmul.f32.gmra.mxu0 %v666
        %v730 = vpop.f32.mrf.mxu0
        %v731 = vadd.f32 %v636, %v730
        %732 = vmatmul.f32.gmra.mxu0 %v669
        %v733 = vpop.f32.mrf.mxu0
        %v734 = vadd.f32 %v636, %v733
        %735 = vmatmul.f32.gmra.mxu0 %v672
        %v736 = vpop.f32.mrf.mxu0
        %v737 = vadd.f32 %v636, %v736
        %738 = vmatmul.f32.gmra.mxu0 %v675
        %v739 = vpop.f32.mrf.mxu0
        %v740 = vadd.f32 %v636, %v739
        %741 = vmatmul.f32.gmra.mxu0 %v678
        %v742 = vpop.f32.mrf.mxu0
        %v743 = vadd.f32 %v636, %v742
        %744 = vmatmul.f32.gmra.mxu0 %v681
        %v745 = vpop.f32.mrf.mxu0
        %v746 = vadd.f32 %v636, %v745
        %747 = vmatmul.f32.gmra.mxu0 %v684
        %v748 = vpop.f32.mrf.mxu0
        %v749 = vadd.f32 %v636, %v748
        %750 = vdwg.mxu0
        %vm751 = vcmask 261120
        %752 = vst.msk [vmem:[%s280] sm:$0xff] %vm751, %v704
        %753 = vst.msk [vmem:[%s280 + $0x8] sm:$0xff] %vm751, %v707
        %754 = vst.msk [vmem:[%s280 + $0x10] sm:$0xff] %vm751, %v710
        %755 = vst.msk [vmem:[%s280 + $0x18] sm:$0xff] %vm751, %v713
        %756 = vst.msk [vmem:[%s280 + $0x20] sm:$0xff] %vm751, %v716
        %757 = vst.msk [vmem:[%s280 + $0x28] sm:$0xff] %vm751, %v719
        %758 = vst.msk [vmem:[%s280 + $0x30] sm:$0xff] %vm751, %v722
        %759 = vst.msk [vmem:[%s280 + $0x38] sm:$0xff] %vm751, %v725
        %760 = vst.msk [vmem:[%s280 + $0x40] sm:$0xff] %vm751, %v728
        %761 = vst.msk [vmem:[%s280 + $0x48] sm:$0xff] %vm751, %v731
        %762 = vst.msk [vmem:[%s280 + $0x50] sm:$0xff] %vm751, %v734
        %763 = vst.msk [vmem:[%s280 + $0x58] sm:$0xff] %vm751, %v737
        %764 = vst.msk [vmem:[%s280 + $0x60] sm:$0xff] %vm751, %v740
        %765 = vst.msk [vmem:[%s280 + $0x68] sm:$0xff] %vm751, %v743
        %766 = vst.msk [vmem:[%s280 + $0x70] sm:$0xff] %vm751, %v746
        %767 = vst.msk [vmem:[%s280 + $0x78] sm:$0xff] %vm751, %v749
        %s768 = sand.u32 %s178, 1
        %s769 = sand.u32 %s178, 1
        %s770 = smul.addr %s769, 128
        %s771 = scalar_lea.vmem [#allocation2], %s770
        // Predicated region
        $region49: #{tpu_custom_call.1} parent=47 // pred_check
          %p772 = pneg %p188
        $region50: #{tpu_custom_call.1} parent=47 // pred_check_branch
          %774 = sbr.rel (%p772) target = $region52
        $region51: #{tpu_custom_call.1} parent=47 // pred_region
          %s775 = smul.u32 16, %s18
          %s776 = ssub.s32 25, %s775
          %p777 = scmp.lt.s32.totalorder %s776, 16
          %s778 = scalar_select %p777, %s776, 16
          %s779 = smul.u32 8, %s778
          %p780 = scmp.ne.s32.totalorder 0, %s779
          %s781 = smul.addr %s775, 8
          %s782 = scalar_lea.vmem %s7, %s781
          // Predicated region
          $region53: #{tpu_custom_call.1} parent=51 // pred_check
            %p783 = pneg %p780
          $region54: #{tpu_custom_call.1} parent=51 // pred_check_branch
            %785 = sbr.rel (%p783) target = $region56
          $region55: #{tpu_custom_call.1} parent=51 // pred_region
            // Predicated region
            $region57: #{tpu_custom_call.1} parent=55 // pred_check
              _
            $region58: #{tpu_custom_call.1} parent=55 // pred_check_branch
              %787 = sbr.rel (0) target = $region60
            $region59: #{tpu_custom_call.1} parent=55 // pred_region
              // Predicated region
              $region79: #{tpu_custom_call.1} parent=59 // pred_check
                _
              $region80: #{tpu_custom_call.1} parent=59 // pred_check_branch
                %867 = sbr.rel (0) target = $region82
              $region81: #{tpu_custom_call.1} parent=59 // pred_region
                %s868 = sshrl.u32 %s778, 4
                // While loop
                $region83: #{tpu_custom_call.1} parent=81 // loop_pre_header
                  _
                $region84: #{tpu_custom_call.1} parent=81 // loop_header
                  %s870 = sphi 0, %s872
                  %p871 = scmp.ge.s32.totalorder %s870, %s868
                  %s875 = sphi 0, %s912
                  %s876 = sphi %s771, %s915
                  %s877 = sphi %s782, %s916
                $region85: #{tpu_custom_call.1} parent=81 // loop_header_branch
                  %874 = sbr.rel (%p871) target = $region89
                $region86: #{tpu_custom_call.1} parent=81 // loop_body
                  %v878 = vld [vmem:[%s876] sm:$0xff]
                  %879 = vst [vmem:[%s877] sm:$0xff] %v878
                  %v880 = vld [vmem:[%s876 + $0x8] sm:$0xff]
                  %881 = vst [vmem:[%s877 + $0x8] sm:$0xff] %v880
                  %v882 = vld [vmem:[%s876 + $0x10] sm:$0xff]
                  %883 = vst [vmem:[%s877 + $0x10] sm:$0xff] %v882
                  %v884 = vld [vmem:[%s876 + $0x18] sm:$0xff]
                  %885 = vst [vmem:[%s877 + $0x18] sm:$0xff] %v884
                  %v886 = vld [vmem:[%s876 + $0x20] sm:$0xff]
                  %887 = vst [vmem:[%s877 + $0x20] sm:$0xff] %v886
                  %v888 = vld [vmem:[%s876 + $0x28] sm:$0xff]
                  %889 = vst [vmem:[%s877 + $0x28] sm:$0xff] %v888
                  %v890 = vld [vmem:[%s876 + $0x30] sm:$0xff]
                  %891 = vst [vmem:[%s877 + $0x30] sm:$0xff] %v890
                  %v892 = vld [vmem:[%s876 + $0x38] sm:$0xff]
                  %893 = vst [vmem:[%s877 + $0x38] sm:$0xff] %v892
                  %v894 = vld [vmem:[%s876 + $0x40] sm:$0xff]
                  %895 = vst [vmem:[%s877 + $0x40] sm:$0xff] %v894
                  %v896 = vld [vmem:[%s876 + $0x48] sm:$0xff]
                  %897 = vst [vmem:[%s877 + $0x48] sm:$0xff] %v896
                  %v898 = vld [vmem:[%s876 + $0x50] sm:$0xff]
                  %899 = vst [vmem:[%s877 + $0x50] sm:$0xff] %v898
                  %v900 = vld [vmem:[%s876 + $0x58] sm:$0xff]
                  %901 = vst [vmem:[%s877 + $0x58] sm:$0xff] %v900
                  %v902 = vld [vmem:[%s876 + $0x60] sm:$0xff]
                  %903 = vst [vmem:[%s877 + $0x60] sm:$0xff] %v902
                  %v904 = vld [vmem:[%s876 + $0x68] sm:$0xff]
                  %905 = vst [vmem:[%s877 + $0x68] sm:$0xff] %v904
                  %v906 = vld [vmem:[%s876 + $0x70] sm:$0xff]
                  %907 = vst [vmem:[%s877 + $0x70] sm:$0xff] %v906
                  %v908 = vld [vmem:[%s876 + $0x78] sm:$0xff]
                  %909 = vst [vmem:[%s877 + $0x78] sm:$0xff] %v908
                  %s910 = sadd.s32 1, %s875
                  %p911 = scmp.ge.s32.totalorder %s910, %s868
                  %s912 = scalar_select %p911, 0, %s910
                  %s913 = smul.u32 %s912, 128
                  %s914 = smul.u32 %s912, 128
                  %s915 = scalar_lea.vmem %s771, %s913 [#allocation2]
                  %s916 = scalar_lea.vmem %s782, %s914
                $region87: #{tpu_custom_call.1} parent=81 // loop_footer
                  %s872 = sadd.s32 %s870, 1
                $region88: #{tpu_custom_call.1} parent=81 // loop_footer_branch
                  %869 = sbr.rel target = $region84
                $region89: #{tpu_custom_call.1} parent=81 // loop_exit
                  _
                %s917 = sshrl.u32 %s778, 4
                %s918 = sand.u32 %s778, 15
                %s919 = smul.u32 %s917, 16
                %s920 = smul.u32 8, %s919
                %s921 = scalar_lea.vmem %s771, %s920 [#allocation2]
                %s922 = smul.u32 8, %s919
                %s923 = scalar_lea.vmem %s782, %s922
                // While loop
                $region90: #{tpu_custom_call.1} parent=81 // loop_pre_header
                  _
                $region91: #{tpu_custom_call.1} parent=81 // loop_header
                  %s925 = sphi 0, %s927
                  %p926 = scmp.ge.s32.totalorder %s925, %s918
                  %s930 = sphi 0, %s937
                  %s931 = sphi %s921, %s940
                  %s932 = sphi %s923, %s941
                $region92: #{tpu_custom_call.1} parent=81 // loop_header_branch
                  %929 = sbr.rel (%p926) target = $region96
                $region93: #{tpu_custom_call.1} parent=81 // loop_body
                  %v933 = vld [vmem:[%s931] sm:$0xff]
                  %934 = vst [vmem:[%s932] sm:$0xff] %v933
                  %s935 = sadd.s32 1, %s930
                  %p936 = scmp.ge.s32.totalorder %s935, %s918
                  %s937 = scalar_select %p936, 0, %s935
                  %s938 = smul.u32 %s937, 8
                  %s939 = smul.u32 %s937, 8
                  %s940 = scalar_lea.vmem %s921, %s938 [#allocation2]
                  %s941 = scalar_lea.vmem %s923, %s939
                $region94: #{tpu_custom_call.1} parent=81 // loop_footer
                  %s927 = sadd.s32 %s925, 1
                $region95: #{tpu_custom_call.1} parent=81 // loop_footer_branch
                  %924 = sbr.rel target = $region91
                $region96: #{tpu_custom_call.1} parent=81 // loop_exit
                  _
              $region82: #{tpu_custom_call.1} parent=59 // pred_fallthru
                _
              // Predicated region
              $region97: #{tpu_custom_call.1} parent=59 // pred_check
                _
              $region98: #{tpu_custom_call.1} parent=59 // pred_check_branch
                %943 = sbr.rel target = $region100
              $region99: #{tpu_custom_call.1} parent=59 // pred_region
                _
              $region100: #{tpu_custom_call.1} parent=59 // pred_fallthru
                _
            $region60: #{tpu_custom_call.1} parent=55 // pred_fallthru
              _
            // Predicated region
            $region61: #{tpu_custom_call.1} parent=55 // pred_check
              _
            $region62: #{tpu_custom_call.1} parent=55 // pred_check_branch
              %789 = sbr.rel target = $region64
            $region63: #{tpu_custom_call.1} parent=55 // pred_region
              %s791 = ssub.s32 256, 1
              %s792 = sshrl.u32 %s778, 4
              // While loop
              $region65: #{tpu_custom_call.1} parent=63 // loop_pre_header
                _
              $region66: #{tpu_custom_call.1} parent=63 // loop_header
                %s794 = sphi 0, %s796
                %p795 = scmp.ge.s32.totalorder %s794, %s792
                %s799 = sphi 0, %s836
                %s800 = sphi %s771, %s839
                %s801 = sphi %s782, %s840
              $region67: #{tpu_custom_call.1} parent=63 // loop_header_branch
                %798 = sbr.rel (%p795) target = $region71
              $region68: #{tpu_custom_call.1} parent=63 // loop_body
                %v802 = vld [vmem:[%s800] sm:%s791]
                %803 = vst [vmem:[%s801] sm:%s791] %v802
                %v804 = vld [vmem:[%s800 + $0x8] sm:%s791]
                %805 = vst [vmem:[%s801 + $0x8] sm:%s791] %v804
                %v806 = vld [vmem:[%s800 + $0x10] sm:%s791]
                %807 = vst [vmem:[%s801 + $0x10] sm:%s791] %v806
                %v808 = vld [vmem:[%s800 + $0x18] sm:%s791]
                %809 = vst [vmem:[%s801 + $0x18] sm:%s791] %v808
                %v810 = vld [vmem:[%s800 + $0x20] sm:%s791]
                %811 = vst [vmem:[%s801 + $0x20] sm:%s791] %v810
                %v812 = vld [vmem:[%s800 + $0x28] sm:%s791]
                %813 = vst [vmem:[%s801 + $0x28] sm:%s791] %v812
                %v814 = vld [vmem:[%s800 + $0x30] sm:%s791]
                %815 = vst [vmem:[%s801 + $0x30] sm:%s791] %v814
                %v816 = vld [vmem:[%s800 + $0x38] sm:%s791]
                %817 = vst [vmem:[%s801 + $0x38] sm:%s791] %v816
                %v818 = vld [vmem:[%s800 + $0x40] sm:%s791]
                %819 = vst [vmem:[%s801 + $0x40] sm:%s791] %v818
                %v820 = vld [vmem:[%s800 + $0x48] sm:%s791]
                %821 = vst [vmem:[%s801 + $0x48] sm:%s791] %v820
                %v822 = vld [vmem:[%s800 + $0x50] sm:%s791]
                %823 = vst [vmem:[%s801 + $0x50] sm:%s791] %v822
                %v824 = vld [vmem:[%s800 + $0x58] sm:%s791]
                %825 = vst [vmem:[%s801 + $0x58] sm:%s791] %v824
                %v826 = vld [vmem:[%s800 + $0x60] sm:%s791]
                %827 = vst [vmem:[%s801 + $0x60] sm:%s791] %v826
                %v828 = vld [vmem:[%s800 + $0x68] sm:%s791]
                %829 = vst [vmem:[%s801 + $0x68] sm:%s791] %v828
                %v830 = vld [vmem:[%s800 + $0x70] sm:%s791]
                %831 = vst [vmem:[%s801 + $0x70] sm:%s791] %v830
                %v832 = vld [vmem:[%s800 + $0x78] sm:%s791]
                %833 = vst [vmem:[%s801 + $0x78] sm:%s791] %v832
                %s834 = sadd.s32 1, %s799
                %p835 = scmp.ge.s32.totalorder %s834, %s792
                %s836 = scalar_select %p835, 0, %s834
                %s837 = smul.u32 %s836, 128
                %s838 = smul.u32 %s836, 128
                %s839 = scalar_lea.vmem %s771, %s837 [#allocation2]
                %s840 = scalar_lea.vmem %s782, %s838
              $region69: #{tpu_custom_call.1} parent=63 // loop_footer
                %s796 = sadd.s32 %s794, 1
              $region70: #{tpu_custom_call.1} parent=63 // loop_footer_branch
                %793 = sbr.rel target = $region66
              $region71: #{tpu_custom_call.1} parent=63 // loop_exit
                _
              %s841 = sshrl.u32 %s778, 4
              %s842 = sand.u32 %s778, 15
              %s843 = smul.u32 %s841, 16
              %s844 = smul.u32 8, %s843
              %s845 = scalar_lea.vmem %s771, %s844 [#allocation2]
              %s846 = smul.u32 8, %s843
              %s847 = scalar_lea.vmem %s782, %s846
              // While loop
              $region72: #{tpu_custom_call.1} parent=63 // loop_pre_header
                _
              $region73: #{tpu_custom_call.1} parent=63 // loop_header
                %s849 = sphi 0, %s851
                %p850 = scmp.ge.s32.totalorder %s849, %s842
                %s854 = sphi 0, %s861
                %s855 = sphi %s845, %s864
                %s856 = sphi %s847, %s865
              $region74: #{tpu_custom_call.1} parent=63 // loop_header_branch
                %853 = sbr.rel (%p850) target = $region78
              $region75: #{tpu_custom_call.1} parent=63 // loop_body
                %v857 = vld [vmem:[%s855] sm:%s791]
                %858 = vst [vmem:[%s856] sm:%s791] %v857
                %s859 = sadd.s32 1, %s854
                %p860 = scmp.ge.s32.totalorder %s859, %s842
                %s861 = scalar_select %p860, 0, %s859
                %s862 = smul.u32 %s861, 8
                %s863 = smul.u32 %s861, 8
                %s864 = scalar_lea.vmem %s845, %s862 [#allocation2]
                %s865 = scalar_lea.vmem %s847, %s863
              $region76: #{tpu_custom_call.1} parent=63 // loop_footer
                %s851 = sadd.s32 %s849, 1
              $region77: #{tpu_custom_call.1} parent=63 // loop_footer_branch
                %848 = sbr.rel target = $region73
              $region78: #{tpu_custom_call.1} parent=63 // loop_exit
                _
            $region64: #{tpu_custom_call.1} parent=55 // pred_fallthru
              _
          $region56: #{tpu_custom_call.1} parent=51 // pred_fallthru
            _
          %944 = vnop
        $region52: #{tpu_custom_call.1} parent=47 // pred_fallthru
          _
      $region48: #{tpu_custom_call.1} parent=5 // pred_fallthru
        _
      %p945 = scmp.le.s32.totalorder 2, %s13
      // Predicated region
      $region101: #{tpu_custom_call.1} parent=5 // pred_check
        %p946 = pneg %p945
      $region102: #{tpu_custom_call.1} parent=5 // pred_check_branch
        %948 = sbr.rel (%p946) target = $region104
      $region103: #{tpu_custom_call.1} parent=5 // pred_region
        %s949 = ssub.s32 %s13, 2
        // Predicated region
        $region105: #{tpu_custom_call.1} parent=103 // pred_check
          %p950 = pneg %p194
        $region106: #{tpu_custom_call.1} parent=103 // pred_check_branch
          %952 = sbr.rel (%p950) target = $region108
        $region107: #{tpu_custom_call.1} parent=103 // pred_region
          %s953 = sand.u32 %s179, 1
          %s954 = sand.u32 %s179, 1
          %s955 = smul.addr %s954, 128
          %s956 = scalar_lea.vmem [#allocation2], %s955
        $region108: #{tpu_custom_call.1} parent=103 // pred_fallthru
          _
      $region104: #{tpu_custom_call.1} parent=5 // pred_fallthru
        _
    $region6: #{tpu_custom_call.1} parent=1 // loop_footer
      %s17 = sadd.s32 1, %s13
    $region7: #{tpu_custom_call.1} parent=1 // loop_footer_branch
      %12 = sbr.rel target = $region3
    $region8: #{tpu_custom_call.1} parent=1 // loop_exit
      _

</llo_original>
